<compile_context>
chip_gen: v7x
topology: tpu7x:2x2x1
jax: 0.10.0
libtpu: 0.0.40
codegen_flags: <defaults>
</compile_context>

<pallas_src>
import jax
import jax.numpy as jnp
from jax.experimental import pallas as pl
from jax.experimental.pallas import tpu as pltpu


H_PAD = 128         # hidden_channels (64) padded to a lane-dense 128
MAX_TILE_N = 1024   # A_hat row/col tile: 2 MiB bf16 block, ~6 MiB total per-call VMEM
TE = 512            # edges per link-head grid step (lane-dense output tile)


def _round_up(x, m):
    return ((x + m - 1) // m) * m


# --------------------------- row-parallel GCN layer ---------------------------

def _gcn_layer_kernel(a_ref, x_ref, w_ref, b_ref, o_ref, acc_ref):
    """One grid step of Z = A_hat @ (X @ W) + b for one (row tile, k tile)."""
    k = pl.program_id(1)

    @pl.when(k == 0)
    def _zero_acc():
        acc_ref[...] = jnp.zeros_like(acc_ref)

    # Feature transform of this k-tile of X (bf16 x bf16 -> f32, then bf16 for the
    # A matmul).  Recomputed per row tile; free while streaming dense A binds HBM.
    xw = jnp.dot(x_ref[...], w_ref[...], preferred_element_type=jnp.float32)
    acc_ref[...] += jnp.dot(a_ref[...], xw.astype(jnp.bfloat16),
                            preferred_element_type=jnp.float32)

    # Epilogue: bias add (hoisted out of the k loop) + single write of the row tile.
    @pl.when(k == pl.num_programs(1) - 1)
    def _finish():
        o_ref[...] = (acc_ref[...] + b_ref[...]).astype(o_ref.dtype)


def _gcn_layer(a_p, x_p, w_p, b_p, tile, out_dtype):
    """Tiled Z = A_hat @ (X @ W) + b on padded bf16 inputs. Returns (n_pad, 128)."""
    n_pad = a_p.shape[0]
    f_pad = x_p.shape[1]
    n_blk = n_pad // tile

    # Explicit VMEM budget (double-buffered inputs/outputs + f32 accumulator).
    vmem_bytes = (2 * tile * tile * 2          # A block (bf16)
                  + 2 * tile * f_pad * 2       # X block (bf16)
                  + 2 * f_pad * H_PAD * 2      # W (bf16, resident)
                  + 2 * H_PAD * 4              # bias
                  + 2 * tile * H_PAD * 4       # output block (f32)
                  + tile * H_PAD * 4)          # accumulator scratch
    vmem_limit = int(min(max(2 * vmem_bytes, 32 * 1024 * 1024), 64 * 1024 * 1024))

    return pl.pallas_call(
        _gcn_layer_kernel,
        out_shape=jax.ShapeDtypeStruct((n_pad, H_PAD), out_dtype),
        grid_spec=pltpu.PrefetchScalarGridSpec(
            num_scalar_prefetch=0,
            grid=(n_blk, n_blk),                                   # (rows, reduction)
            in_specs=[
                pl.BlockSpec((tile, tile), lambda i, k: (i, k)),   # A_hat (bf16)
                pl.BlockSpec((tile, f_pad), lambda i, k: (k, 0)),  # X (bf16)
                pl.BlockSpec((f_pad, H_PAD), lambda i, k: (0, 0)),  # W (resident)
                pl.BlockSpec((1, H_PAD), lambda i, k: (0, 0)),      # b (resident)
            ],
            out_specs=pl.BlockSpec((tile, H_PAD), lambda i, k: (i, 0)),
            scratch_shapes=[pltpu.VMEM((tile, H_PAD), jnp.float32)],
        ),
        compiler_params=pltpu.CompilerParams(
            dimension_semantics=("parallel", "arbitrary"),
            vmem_limit_bytes=vmem_limit),
    )(a_p, x_p, w_p, b_p)


def gcn_encoder_2layer(a_hat, x, w1, b1, w2, b2):
    """Two stacked GCNConv layers. Returns the zero-padded (n_pad, 128) f32 embedding."""
    n, f = x.shape
    tile = min(MAX_TILE_N, _round_up(max(n, 8), 128))
    n_pad = _round_up(n, tile)
    f_pad = _round_up(f, 128)

    # TODO(synk): for realistically sparse protein/substrate graphs, replace the dense
    # bf16 A_hat stream with a block-sparse SpMM (scalar-prefetched block offsets,
    # pl.when to skip empty tiles) -- the biggest remaining lever at scale.
    a_p = jnp.zeros((n_pad, n_pad), jnp.bfloat16).at[:n, :n].set(
        a_hat.astype(jnp.bfloat16))
    x_p = jnp.zeros((n_pad, f_pad), jnp.bfloat16).at[:n, :f].set(x.astype(jnp.bfloat16))
    w1_p = jnp.zeros((f_pad, H_PAD), jnp.bfloat16).at[:f, :w1.shape[1]].set(
        w1.astype(jnp.bfloat16))
    b1_p = jnp.zeros((1, H_PAD), jnp.float32).at[0, :b1.shape[0]].set(b1)
    w2_p = jnp.zeros((H_PAD, H_PAD), jnp.bfloat16).at[:w2.shape[0], :w2.shape[1]].set(
        w2.astype(jnp.bfloat16))
    b2_p = jnp.zeros((1, H_PAD), jnp.float32).at[0, :b2.shape[0]].set(b2)

    # Layer 1 writes z1 to HBM as bf16 (n_pad * 256 B -- negligible vs A traffic);
    # layer 2 consumes it directly.
    z1 = _gcn_layer(a_p, x_p, w1_p, b1_p, tile, jnp.bfloat16)
    z2 = _gcn_layer(a_p, z1, w2_p, b2_p, tile, jnp.float32)
    return z2


# ------------------------- fused projection + MLP link head -------------------

def _head_kernel(zp_ref, zs_ref, wpt_ref, wpb_ref, bp_ref,
                 w1_ref, b1_ref, w2_ref, b2_ref, o_ref):
    # concat([zp, zs], -1) @ W_proj  ==  zp @ W_proj[:64] + zs @ W_proj[64:]
    z_proj = (jnp.dot(zp_ref[...], wpt_ref[...], preferred_element_type=jnp.float32)
              + jnp.dot(zs_ref[...], wpb_ref[...], preferred_element_type=jnp.float32)
              + bp_ref[...])
    h = jnp.maximum(
        jnp.dot(z_proj.astype(jnp.bfloat16), w1_ref[...],
                preferred_element_type=jnp.float32) + b1_ref[...],
        0.0)
    # Final Linear(64 -> 1) written as a lane-dense (1, TE) row (no masked (E,1) stores):
    # transpose h once, broadcast-multiply by w2, reduce over sublanes.
    h_t = jnp.transpose(h)                                        # (128, TE)
    o_ref[...] = jnp.sum(h_t * w2_ref[...], axis=0, keepdims=True) + b2_ref[0, 0]


def link_head(z_p_pad, z_s_pad, edges, params, hidden):
    e = edges.shape[1]
    e_pad = _round_up(max(e, 1), TE)

    # Edge gather in plain XLA (tiny vs the encoder); padded tail gathers node 0 and
    # its scores are sliced off below.
    # TODO(synk): for very large E, move this to an in-kernel DMA gather driven by
    # scalar-prefetched indices instead of materializing (E_pad, 128) slabs.
    idx_p = jnp.zeros((e_pad,), jnp.int32).at[:e].set(edges[0].astype(jnp.int32))
    idx_s = jnp.zeros((e_pad,), jnp.int32).at[:e].set(edges[1].astype(jnp.int32))
    zp_g = jnp.take(z_p_pad, idx_p, axis=0).astype(jnp.bfloat16)   # (e_pad, 128)
    zs_g = jnp.take(z_s_pad, idx_s, axis=0).astype(jnp.bfloat16)

    wp = params["proj_w"]                      # (128, 128), (in, out) layout
    wpt = jnp.zeros((H_PAD, 128), jnp.bfloat16).at[:hidden, :].set(
        wp[:hidden, :].astype(jnp.bfloat16))
    wpb = jnp.zeros((H_PAD, 128), jnp.bfloat16).at[:hidden, :].set(
        wp[hidden:2 * hidden, :].astype(jnp.bfloat16))
    bp = params["proj_b"].reshape(1, 128).astype(jnp.float32)
    w1 = jnp.zeros((128, H_PAD), jnp.bfloat16).at[:, :hidden].set(
        params["lp1_w"].astype(jnp.bfloat16))
    b1 = jnp.zeros((1, H_PAD), jnp.float32).at[0, :hidden].set(params["lp1_b"])
    w2 = jnp.zeros((H_PAD, 1), jnp.float32).at[:hidden, :].set(params["lp2_w"])
    b2 = params["lp2_b"].reshape(1, 1)

    def resident(shape):
        return pl.BlockSpec(shape, lambda ei: (0, 0))

    out = pl.pallas_call(
        _head_kernel,
        out_shape=jax.ShapeDtypeStruct((1, e_pad), jnp.float32),
        grid_spec=pltpu.PrefetchScalarGridSpec(
            num_scalar_prefetch=0,
            grid=(e_pad // TE,),
            in_specs=[
                pl.BlockSpec((TE, H_PAD), lambda ei: (ei, 0)),      # gathered z_protein
                pl.BlockSpec((TE, H_PAD), lambda ei: (ei, 0)),      # gathered z_substrate
                resident((H_PAD, 128)),                             # W_proj (protein half)
                resident((H_PAD, 128)),                             # W_proj (substrate half)
                resident((1, 128)),                                 # b_proj
                resident((128, H_PAD)),                             # link_predictor[0].W
                resident((1, H_PAD)),                               # link_predictor[0].b
                resident((H_PAD, 1)),                               # link_predictor[2].W
                pl.BlockSpec(memory_space=pltpu.MemorySpace.SMEM),  # link_predictor[2].b
            ],
            out_specs=pl.BlockSpec((1, TE), lambda ei: (0, ei)),
        ),
        compiler_params=pltpu.CompilerParams(dimension_semantics=("parallel",)),
    )(zp_g, zs_g, wpt, wpb, bp, w1, b1, w2, b2)
    return out[0, :e]


# --------------------------------- JAX glue -----------------------------------

def normalized_adjacency(edge_index, num_nodes):
    """Dense PyG gcn_norm: D^-1/2 (A + remaining self-loops) D^-1/2, A[dst, src] scatter-add."""
    src, dst = edge_index[0], edge_index[1]
    adj = jnp.zeros((num_nodes, num_nodes), jnp.float32).at[dst, src].add(1.0)
    diag = jnp.diagonal(adj)
    adj = adj + jnp.diag(jnp.where(diag == 0.0, 1.0, 0.0))   # add_remaining_self_loops
    deg = adj.sum(axis=1)
    d_inv_sqrt = jnp.where(deg > 0.0, jax.lax.rsqrt(deg), 0.0)
    return d_inv_sqrt[:, None] * adj * d_inv_sqrt[None, :]


def init_params(key, protein_dim, substrate_dim, hidden_channels):
    ks = jax.random.split(key, 7)

    def lin(k, fan_in, fan_out):
        kw, kb = jax.random.split(k)
        scale = 1.0 / jnp.sqrt(jnp.float32(fan_in))
        w = jax.random.uniform(kw, (fan_in, fan_out), jnp.float32, -scale, scale)
        b = jax.random.uniform(kb, (fan_out,), jnp.float32, -scale, scale)
        return w, b

    p = {}
    p["protein_conv1_w"], p["protein_conv1_b"] = lin(ks[0], protein_dim, hidden_channels)
    p["substrate_conv1_w"], p["substrate_conv1_b"] = lin(ks[1], substrate_dim, hidden_channels)
    p["protein_conv2_w"], p["protein_conv2_b"] = lin(ks[2], hidden_channels, hidden_channels)
    p["substrate_conv2_w"], p["substrate_conv2_b"] = lin(ks[3], hidden_channels, hidden_channels)
    p["proj_w"], p["proj_b"] = lin(ks[4], 128, 128)
    p["lp1_w"], p["lp1_b"] = lin(ks[5], hidden_channels * 2, hidden_channels)
    p["lp2_w"], p["lp2_b"] = lin(ks[6], hidden_channels, 1)
    return p


def gcn_link_predictor_forward(params, x_dict, edge_index_dict, edges, hidden_channels=64):
    assert hidden_channels * 2 == 128, "projection_layer is Linear(128, 128)"
    pp_key = ("protein", "interacts_with", "protein")
    ss_key = ("substrate", "interacts_with", "substrate")

    def encode(node, key, w1, b1, w2, b2):
        x = x_dict[node]
        n = x.shape[0]
        if key in edge_index_dict:
            a_hat = normalized_adjacency(edge_index_dict[key], n)
            return gcn_encoder_2layer(a_hat, x, params[w1], params[b1],
                                      params[w2], params[b2])
        # TODO(synk): the reference module's no-edge fallback feeds raw features of a
        # different width into Linear(128,128) and would fail in PyTorch too; we only
        # mirror its structure by zero-padding the raw features into the embedding slab.
        n_pad = _round_up(max(n, 8), 128)
        c = min(x.shape[1], H_PAD)
        return jnp.zeros((n_pad, H_PAD), jnp.float32).at[:n, :c].set(x[:, :c])

    z_protein = encode("protein", pp_key, "protein_conv1_w", "protein_conv1_b",
                       "protein_conv2_w", "protein_conv2_b")
    z_substrate = encode("substrate", ss_key, "substrate_conv1_w", "substrate_conv1_b",
                         "substrate_conv2_w", "substrate_conv2_b")
    return link_head(z_protein, z_substrate, edges, params, hidden_channels)


def reference_forward(params, x_dict, edge_index_dict, edges):
    """Plain-JAX (f32) reference of the module, used only for a sanity check."""
    def conv(a, x, w, b):
        return a @ (x @ w) + b
    a_p = normalized_adjacency(edge_index_dict[("protein", "interacts_with", "protein")],
                               x_dict["protein"].shape[0])
    a_s = normalized_adjacency(edge_index_dict[("substrate", "interacts_with", "substrate")],
                               x_dict["substrate"].shape[0])
    zp = conv(a_p, conv(a_p, x_dict["protein"], params["protein_conv1_w"],
                        params["protein_conv1_b"]),
              params["protein_conv2_w"], params["protein_conv2_b"])
    zs = conv(a_s, conv(a_s, x_dict["substrate"], params["substrate_conv1_w"],
                        params["substrate_conv1_b"]),
              params["substrate_conv2_w"], params["substrate_conv2_b"])
    zc = jnp.concatenate([zp[edges[0]], zs[edges[1]]], axis=-1)
    zproj = zc @ params["proj_w"] + params["proj_b"]
    h = jnp.maximum(zproj @ params["lp1_w"] + params["lp1_b"], 0.0)
    return (h @ params["lp2_w"] + params["lp2_b"]).squeeze(-1)


# ----------------------------------- main --------------------------------------

if __name__ == "__main__":
    protein_dim = 32
    substrate_dim = 24
    hidden_channels = 64   # forced: projection_layer is Linear(128, 128) = Linear(2*hidden, 2*hidden)
    n_protein = 16
    n_substrate = 12
    n_pp_edges = 20
    n_ss_edges = 14
    n_link_edges = 8

    key = jax.random.PRNGKey(0)
    k_param, k_xp, k_xs, k_e1, k_e2, k_e3 = jax.random.split(key, 6)

    params = init_params(k_param, protein_dim, substrate_dim, hidden_channels)

    x_dict = {
        "protein": jax.random.normal(k_xp, (n_protein, protein_dim), jnp.float32),
        "substrate": jax.random.normal(k_xs, (n_substrate, substrate_dim), jnp.float32),
    }
    edge_index_dict = {
        ("protein", "interacts_with", "protein"):
            jax.random.randint(k_e1, (2, n_pp_edges), 0, n_protein, jnp.int32),
        ("substrate", "interacts_with", "substrate"):
            jax.random.randint(k_e2, (2, n_ss_edges), 0, n_substrate, jnp.int32),
    }
    ke_p, ke_s = jax.random.split(k_e3)
    edges = jnp.stack(
        [jax.random.randint(ke_p, (n_link_edges,), 0, n_protein, jnp.int32),
         jax.random.randint(ke_s, (n_link_edges,), 0, n_substrate, jnp.int32)],
        axis=0,
    )

    scores = gcn_link_predictor_forward(params, x_dict, edge_index_dict, edges,
                                        hidden_channels)
    jax.block_until_ready(scores)
    assert scores.shape == (n_link_edges,), scores.shape

    ref = reference_forward(params, x_dict, edge_index_dict, edges)
    max_err = float(jnp.max(jnp.abs(scores - ref)))
    assert max_err < 5e-2, f"kernel mismatch vs reference, max|diff|={max_err}"
    assert bool(jnp.all(jnp.isfinite(scores)))

    print("KERNEL_OK")
</pallas_src>

<mosaic_0001>
module attributes {stable_mosaic.version = 11 : i64} {
  func.func @_gcn_layer_kernel(%arg0: i32, %arg1: i32, %arg2: memref<128x128xbf16, #tpu.memory_space<vmem>>, %arg3: memref<128x128xbf16, #tpu.memory_space<vmem>>, %arg4: memref<128x128xbf16, #tpu.memory_space<vmem>>, %arg5: memref<1x128xf32, #tpu.memory_space<vmem>>, %arg6: memref<128x128xbf16, #tpu.memory_space<vmem>>, %arg7: memref<128x128xf32, #tpu.memory_space<vmem>>) attributes {dimension_semantics = [#tpu.dimension_semantics<parallel>, #tpu.dimension_semantics<arbitrary>], iteration_bounds = array<i64: 1, 1>, scalar_prefetch = 0 : i64, scratch_operands = 1 : i64, tpu.core_type = #tpu.core_type<tc>, window_params = [{transform_indices = @transform_0, window_bounds = array<i64: 128, 128>}, {transform_indices = @transform_1, window_bounds = array<i64: 128, 128>}, {pipeline_mode = #tpu.pipeline_mode<synchronous>, transform_indices = @transform_2, window_bounds = array<i64: 128, 128>}, {pipeline_mode = #tpu.pipeline_mode<synchronous>, transform_indices = @transform_3, window_bounds = array<i64: 1, 128>}, {transform_indices = @transform_4, window_bounds = array<i64: 128, 128>}]} {
    %c0_i32 = arith.constant 0 : i32
    %0 = arith.cmpi eq, %arg1, %c0_i32 : i32
    %1 = arith.extui %0 : i1 to i32
    %c0_i32_0 = arith.constant 0 : i32
    %2 = arith.cmpi ne, %1, %c0_i32_0 : i32
    scf.if %2 {
      %cst_13 = arith.constant 0.000000e+00 : f32
      %15 = vector.broadcast %cst_13 : f32 to vector<128x128xf32>
      %c0_14 = arith.constant 0 : index
      %c0_15 = arith.constant 0 : index
      %16 = vector.load %arg7[%c0_14, %c0_15] : memref<128x128xf32, #tpu.memory_space<vmem>>, vector<128x128xf32>
      tpu.vector_store %arg7[%c0_14, %c0_15], %15 {strides = array<i32>} : memref<128x128xf32, #tpu.memory_space<vmem>>, vector<128x128xf32>,
    } else {
    }
    %c0 = arith.constant 0 : index
    %c0_1 = arith.constant 0 : index
    %3 = vector.load %arg3[%c0, %c0_1] : memref<128x128xbf16, #tpu.memory_space<vmem>>, vector<128x128xbf16>
    %c0_2 = arith.constant 0 : index
    %c0_3 = arith.constant 0 : index
    %4 = vector.load %arg4[%c0_2, %c0_3] : memref<128x128xbf16, #tpu.memory_space<vmem>>, vector<128x128xbf16>
    %cst = arith.constant dense<0.000000e+00> : vector<128x128xf32>
    %5 = tpu.matmul %3, %4, %cst {dimension_numbers = #tpu.dot_dimension_numbers<[1], [0], [0], [1], [0, 0, 1, 1], [], []>} : vector<128x128xbf16>, vector<128x128xbf16>, vector<128x128xf32> -> vector<128x128xf32>
    %c0_4 = arith.constant 0 : index
    %c0_5 = arith.constant 0 : index
    %6 = vector.load %arg7[%c0_4, %c0_5] : memref<128x128xf32, #tpu.memory_space<vmem>>, vector<128x128xf32>
    %c0_6 = arith.constant 0 : index
    %c0_7 = arith.constant 0 : index
    %7 = vector.load %arg2[%c0_6, %c0_7] : memref<128x128xbf16, #tpu.memory_space<vmem>>, vector<128x128xbf16>
    %8 = arith.truncf %5 : vector<128x128xf32> to vector<128x128xbf16>
    %cst_8 = arith.constant dense<0.000000e+00> : vector<128x128xf32>
    %9 = tpu.matmul %7, %8, %cst_8 {dimension_numbers = #tpu.dot_dimension_numbers<[1], [0], [0], [1], [0, 0, 1, 1], [], []>} : vector<128x128xbf16>, vector<128x128xbf16>, vector<128x128xf32> -> vector<128x128xf32>
    %10 = arith.addf %6, %9 : vector<128x128xf32>
    %c0_9 = arith.constant 0 : index
    %c0_10 = arith.constant 0 : index
    %11 = vector.load %arg7[%c0_9, %c0_10] : memref<128x128xf32, #tpu.memory_space<vmem>>, vector<128x128xf32>
    tpu.vector_store %arg7[%c0_9, %c0_10], %10 {strides = array<i32>} : memref<128x128xf32, #tpu.memory_space<vmem>>, vector<128x128xf32>,
    %c0_i32_11 = arith.constant 0 : i32
    %12 = arith.cmpi eq, %arg1, %c0_i32_11 : i32
    %13 = arith.extui %12 : i1 to i32
    %c0_i32_12 = arith.constant 0 : i32
    %14 = arith.cmpi ne, %13, %c0_i32_12 : i32
    scf.if %14 {
      %c0_13 = arith.constant 0 : index
      %c0_14 = arith.constant 0 : index
      %15 = vector.load %arg7[%c0_13, %c0_14] : memref<128x128xf32, #tpu.memory_space<vmem>>, vector<128x128xf32>
      %c0_15 = arith.constant 0 : index
      %c0_16 = arith.constant 0 : index
      %16 = vector.load %arg5[%c0_15, %c0_16] : memref<1x128xf32, #tpu.memory_space<vmem>>, vector<1x128xf32>
      %17 = vector.broadcast %16 : vector<1x128xf32> to vector<128x128xf32>
      %18 = arith.addf %15, %17 : vector<128x128xf32>
      %19 = arith.truncf %18 : vector<128x128xf32> to vector<128x128xbf16>
      %c0_17 = arith.constant 0 : index
      %c0_18 = arith.constant 0 : index
      %20 = vector.load %arg6[%c0_17, %c0_18] : memref<128x128xbf16, #tpu.memory_space<vmem>>, vector<128x128xbf16>
      tpu.vector_store %arg6[%c0_17, %c0_18], %19 {strides = array<i32>} : memref<128x128xbf16, #tpu.memory_space<vmem>>, vector<128x128xbf16>,
    } else {
    }
    return
  }
  func.func @transform_0(%arg0: i32, %arg1: i32) -> (i32, i32) {
    %c0_i32 = arith.constant 0 : i32
    return %arg0, %arg1 : i32, i32
  }
  func.func @transform_1(%arg0: i32, %arg1: i32) -> (i32, i32) {
    %c0_i32 = arith.constant 0 : i32
    %c0_i32_0 = arith.constant 0 : i32
    return %arg1, %c0_i32 : i32, i32
  }
  func.func @transform_2(%arg0: i32, %arg1: i32) -> (i32, i32) {
    %c0_i32 = arith.constant 0 : i32
    %c0_i32_0 = arith.constant 0 : i32
    %c0_i32_1 = arith.constant 0 : i32
    return %c0_i32, %c0_i32_0 : i32, i32
  }
  func.func @transform_3(%arg0: i32, %arg1: i32) -> (i32, i32) {
    %c0_i32 = arith.constant 0 : i32
    %c0_i32_0 = arith.constant 0 : i32
    %c0_i32_1 = arith.constant 0 : i32
    return %c0_i32, %c0_i32_0 : i32, i32
  }
  func.func @transform_4(%arg0: i32, %arg1: i32) -> (i32, i32) {
    %c0_i32 = arith.constant 0 : i32
    %c0_i32_0 = arith.constant 0 : i32
    return %arg0, %c0_i32 : i32, i32
  }
}

</mosaic_0001>

<llo_original>
// kernel: tpu_custom_call.1
$region0: #{tpu_custom_call.1}
  #allocation0 [shape = 'u32[]', space=smem, size = 0x4, offset = 0x4, fixed_abs, tag = 'smem constant byte address 0x4 - core index']
  #allocation1 [shape = 'u32[144,128]{1,0:T(1,128)}', space=vmem, size = 0x12000, scoped, tag = 'internal scratch']
  #allocation2 [shape = 'f32[128,128]{1,0:T(8,128)}', space=vmem, size = 0x10000, scoped, tag = 'scratch operand']
  %s0 = inlined_call_operand.hbm [shape: bf16[128,128], index: 0, kind: input, shape index: {}]
  %s1 = inlined_call_operand.hbm [shape: bf16[128,128], index: 1, kind: input, shape index: {}]
  %s2 = inlined_call_operand.hbm [shape: bf16[128,128], index: 2, kind: input, shape index: {}]
  %s3 = inlined_call_operand.vmem [shape: f32[1,128], index: 3, kind: input, shape index: {}]
  %s4 = inlined_call_operand.hbm [shape: bf16[128,128], index: 4, kind: output, shape index: {}]
  %s5 = sld [smem:[#allocation0]]
  $region46: #{tpu_custom_call.1} parent=0
    _
  %s7 = ssub.s32 1, %s5
  %s8 = scalar_select 0, %s7, %s5
  $region1: #{tpu_custom_call.1} parent=0
    #allocation3 [shape = 'u8[32768]{0}', space=vmem, size = 0x8000, scoped, tag = 'input window, operand 0, single buffered']
    #allocation4 [shape = 's32[1]{0}', space=sflag, size = 0x4, scoped, tag = 'scoped memory for tpu_custom_call.1']
    #allocation5 [shape = 's32[1]{0}', space=sflag, size = 0x4, scoped, tag = 'scoped memory for tpu_custom_call.1']
    #allocation6 [shape = 'u8[32768]{0}', space=vmem, size = 0x8000, scoped, tag = 'input window, operand 1, single buffered']
    #allocation7 [shape = 's32[1]{0}', space=sflag, size = 0x4, scoped, tag = 'scoped memory for tpu_custom_call.1']
    #allocation8 [shape = 'u8[32768]{0}', space=vmem, size = 0x8000, scoped, tag = 'input window, operand 2, single buffered']
    #allocation9 [shape = 'u8[32768]{0}', space=vmem, size = 0x8000, scoped, tag = 'output window, operand 0, single buffered']
    %9 = vsyncpa [#allocation4], 0
    %10 = vsyncpa [#allocation7], 0
    %11 = vsyncpa [#allocation5], 0
    // Predicated region
    $region2: #{tpu_custom_call.1} parent=1 // pred_check
      _
    $region3: #{tpu_custom_call.1} parent=1 // pred_check_branch
      %13 = sbr.rel (0) target = $region5
    $region4: #{tpu_custom_call.1} parent=1 // pred_region
      %s15 = ssub.s32 1024, 1024
      %16 = vsyncadd [#allocation4], %s15
      %s17 = sshll.u32 [#allocation3], 4
      %s18 = int_to_ptr.vmem [resolvable:$true] %s17
      %23 = dma.hbm_to_vmem [thread:$0]  %s0, 1024, %s18, [#allocation4], 64, 64, 4
    $region5: #{tpu_custom_call.1} parent=1 // pred_fallthru
      _
    // Predicated region
    $region6: #{tpu_custom_call.1} parent=1 // pred_check
      _
    $region7: #{tpu_custom_call.1} parent=1 // pred_check_branch
      %25 = sbr.rel (0) target = $region9
    $region8: #{tpu_custom_call.1} parent=1 // pred_region
      %s27 = ssub.s32 1024, 1024
      %28 = vsyncadd [#allocation7], %s27
      %s29 = sshll.u32 [#allocation6], 4
      %s30 = int_to_ptr.vmem [resolvable:$true] %s29
      %35 = dma.hbm_to_vmem [thread:$0]  %s1, 1024, %s30, [#allocation7], 64, 64, 4
    $region9: #{tpu_custom_call.1} parent=1 // pred_fallthru
      _
    // Predicated region
    $region10: #{tpu_custom_call.1} parent=1 // pred_check
      _
    $region11: #{tpu_custom_call.1} parent=1 // pred_check_branch
      %37 = sbr.rel (0) target = $region13
    $region12: #{tpu_custom_call.1} parent=1 // pred_region
      %s39 = ssub.s32 1024, 1024
      %40 = vsyncadd [#allocation7], %s39
      %s41 = sshll.u32 [#allocation8], 4
      %s42 = int_to_ptr.vmem [resolvable:$true] %s41
      %47 = dma.hbm_to_vmem [thread:$0]  %s2, 1024, %s42, [#allocation7], 64, 64, 4
    $region13: #{tpu_custom_call.1} parent=1 // pred_fallthru
      _
    // Predicated region
    $region14: #{tpu_custom_call.1} parent=1 // pred_check
      _
    $region15: #{tpu_custom_call.1} parent=1 // pred_check_branch
      %49 = sbr.rel (0) target = $region17
    $region16: #{tpu_custom_call.1} parent=1 // pred_region
      _
    $region17: #{tpu_custom_call.1} parent=1 // pred_fallthru
      _
    // Predicated region
    $region18: #{tpu_custom_call.1} parent=1 // pred_check
      _
    $region19: #{tpu_custom_call.1} parent=1 // pred_check_branch
      %51 = sbr.rel (0) target = $region21
    $region20: #{tpu_custom_call.1} parent=1 // pred_region
      %52 = dma.done [#allocation4], 1024
    $region21: #{tpu_custom_call.1} parent=1 // pred_fallthru
      _
    // Predicated region
    $region22: #{tpu_custom_call.1} parent=1 // pred_check
      _
    $region23: #{tpu_custom_call.1} parent=1 // pred_check_branch
      %54 = sbr.rel (0) target = $region25
    $region24: #{tpu_custom_call.1} parent=1 // pred_region
      %55 = dma.done [#allocation7], 1024
    $region25: #{tpu_custom_call.1} parent=1 // pred_fallthru
      _
    // Predicated region
    $region26: #{tpu_custom_call.1} parent=1 // pred_check
      _
    $region27: #{tpu_custom_call.1} parent=1 // pred_check_branch
      %57 = sbr.rel (0) target = $region29
    $region28: #{tpu_custom_call.1} parent=1 // pred_region
      %58 = dma.done [#allocation7], 1024
    $region29: #{tpu_custom_call.1} parent=1 // pred_fallthru
      _
    %p60 = scmp.eq.s32.totalorder 0, 0
    // Predicated region
    $region30: #{tpu_custom_call.1} parent=1 // pred_check
      %p61 = pneg %p60
    $region31: #{tpu_custom_call.1} parent=1 // pred_check_branch
      %63 = sbr.rel (%p61) target = $region33
    $region32: #{tpu_custom_call.1} parent=1 // pred_region
      %64 = vst [vmem:[#allocation2] sm:$0xff] 0.0
      %65 = vst [vmem:[#allocation2 + $0x8] sm:$0xff] 0.0
      %66 = vst [vmem:[#allocation2 + $0x10] sm:$0xff] 0.0
      %67 = vst [vmem:[#allocation2 + $0x18] sm:$0xff] 0.0
      %68 = vst [vmem:[#allocation2 + $0x20] sm:$0xff] 0.0
      %69 = vst [vmem:[#allocation2 + $0x28] sm:$0xff] 0.0
      %70 = vst [vmem:[#allocation2 + $0x30] sm:$0xff] 0.0
      %71 = vst [vmem:[#allocation2 + $0x38] sm:$0xff] 0.0
      %72 = vst [vmem:[#allocation2 + $0x40] sm:$0xff] 0.0
      %73 = vst [vmem:[#allocation2 + $0x48] sm:$0xff] 0.0
      %74 = vst [vmem:[#allocation2 + $0x50] sm:$0xff] 0.0
      %75 = vst [vmem:[#allocation2 + $0x58] sm:$0xff] 0.0
      %76 = vst [vmem:[#allocation2 + $0x60] sm:$0xff] 0.0
      %77 = vst [vmem:[#allocation2 + $0x68] sm:$0xff] 0.0
      %78 = vst [vmem:[#allocation2 + $0x70] sm:$0xff] 0.0
      %79 = vst [vmem:[#allocation2 + $0x78] sm:$0xff] 0.0
    $region33: #{tpu_custom_call.1} parent=1 // pred_fallthru
      _
    %v80 = vld [vmem:[#allocation6] sm:$0xf]
    %v81 = vld [vmem:[#allocation6 + $0x4] sm:$0xf]
    %v82 = vld [vmem:[#allocation6 + $0x8] sm:$0xf]
    %v83 = vld [vmem:[#allocation6 + $0xc] sm:$0xf]
    %v84 = vld [vmem:[#allocation6 + $0x10] sm:$0xf]
    %v85 = vld [vmem:[#allocation6 + $0x14] sm:$0xf]
    %v86 = vld [vmem:[#allocation6 + $0x18] sm:$0xf]
    %v87 = vld [vmem:[#allocation6 + $0x1c] sm:$0xf]
    %v88 = vld [vmem:[#allocation6 + $0x20] sm:$0xf]
    %v89 = vld [vmem:[#allocation6 + $0x24] sm:$0xf]
    %v90 = vld [vmem:[#allocation6 + $0x28] sm:$0xf]
    %v91 = vld [vmem:[#allocation6 + $0x2c] sm:$0xf]
    %v92 = vld [vmem:[#allocation6 + $0x30] sm:$0xf]
    %v93 = vld [vmem:[#allocation6 + $0x34] sm:$0xf]
    %v94 = vld [vmem:[#allocation6 + $0x38] sm:$0xf]
    %v95 = vld [vmem:[#allocation6 + $0x3c] sm:$0xf]
    %v96 = vld [vmem:[#allocation8] sm:$0xf]
    %v97 = vld [vmem:[#allocation8 + $0x4] sm:$0xf]
    %v98 = vld [vmem:[#allocation8 + $0x8] sm:$0xf]
    %v99 = vld [vmem:[#allocation8 + $0xc] sm:$0xf]
    %v100 = vld [vmem:[#allocation8 + $0x10] sm:$0xf]
    %v101 = vld [vmem:[#allocation8 + $0x14] sm:$0xf]
    %v102 = vld [vmem:[#allocation8 + $0x18] sm:$0xf]
    %v103 = vld [vmem:[#allocation8 + $0x1c] sm:$0xf]
    %v104 = vld [vmem:[#allocation8 + $0x20] sm:$0xf]
    %v105 = vld [vmem:[#allocation8 + $0x24] sm:$0xf]
    %v106 = vld [vmem:[#allocation8 + $0x28] sm:$0xf]
    %v107 = vld [vmem:[#allocation8 + $0x2c] sm:$0xf]
    %v108 = vld [vmem:[#allocation8 + $0x30] sm:$0xf]
    %v109 = vld [vmem:[#allocation8 + $0x34] sm:$0xf]
    %v110 = vld [vmem:[#allocation8 + $0x38] sm:$0xf]
    %v111 = vld [vmem:[#allocation8 + $0x3c] sm:$0xf]
    %v128 = vunpack.c.l.b16 %v80
    %v129 = vunpack.c.l.b16 %v81
    %v130 = vunpack.c.l.b16 %v82
    %v131 = vunpack.c.l.b16 %v83
    %v132 = vunpack.c.l.b16 %v84
    %v133 = vunpack.c.l.b16 %v85
    %v134 = vunpack.c.l.b16 %v86
    %v135 = vunpack.c.l.b16 %v87
    %v136 = vunpack.c.l.b16 %v88
    %v137 = vunpack.c.l.b16 %v89
    %v138 = vunpack.c.l.b16 %v90
    %v139 = vunpack.c.l.b16 %v91
    %v140 = vunpack.c.l.b16 %v92
    %v141 = vunpack.c.l.b16 %v93
    %v142 = vunpack.c.l.b16 %v94
    %v143 = vunpack.c.l.b16 %v95
    %v144 = vpack.c.b16 %v129, %v128
    %v145 = vpack.c.b16 %v131, %v130
    %v146 = vpack.c.b16 %v133, %v132
    %v147 = vpack.c.b16 %v135, %v134
    %v148 = vpack.c.b16 %v137, %v136
    %v149 = vpack.c.b16 %v139, %v138
    %v150 = vpack.c.b16 %v141, %v140
    %v151 = vpack.c.b16 %v143, %v142
    %v176 = vunpack.c.l.b16 %v96
    %v177 = vunpack.c.l.b16 %v97
    %v178 = vunpack.c.l.b16 %v98
    %v179 = vunpack.c.l.b16 %v99
    %v180 = vunpack.c.l.b16 %v100
    %v181 = vunpack.c.l.b16 %v101
    %v182 = vunpack.c.l.b16 %v102
    %v183 = vunpack.c.l.b16 %v103
    %v184 = vunpack.c.l.b16 %v104
    %v185 = vunpack.c.l.b16 %v105
    %v186 = vunpack.c.l.b16 %v106
    %v187 = vunpack.c.l.b16 %v107
    %v188 = vunpack.c.l.b16 %v108
    %v189 = vunpack.c.l.b16 %v109
    %v190 = vunpack.c.l.b16 %v110
    %v191 = vunpack.c.l.b16 %v111
    %v192 = vpack.c.b16 %v177, %v176
    %v193 = vpack.c.b16 %v179, %v178
    %v194 = vpack.c.b16 %v181, %v180
    %v195 = vpack.c.b16 %v183, %v182
    %v196 = vpack.c.b16 %v185, %v184
    %v197 = vpack.c.b16 %v187, %v186
    %v198 = vpack.c.b16 %v189, %v188
    %v199 = vpack.c.b16 %v191, %v190
    %208 = vmatprep.subr.bf16.mxu0 0
    %209 = vmatpush1.bf16.msra.mxu0 %v192
    %210 = vmatprep.subr.bf16.mxu0 0
    %211 = vmatpush1.bf16.msra.mxu0 %v193
    %212 = vmatprep.subr.bf16.mxu0 0
    %213 = vmatpush1.bf16.msra.mxu0 %v194
    %214 = vmatprep.subr.bf16.mxu0 0
    %215 = vmatpush1.bf16.msra.mxu0 %v195
    %216 = vmatprep.subr.bf16.mxu0 0
    %217 = vmatpush1.bf16.msra.mxu0 %v196
    %218 = vmatprep.subr.bf16.mxu0 0
    %219 = vmatpush1.bf16.msra.mxu0 %v197
    %220 = vmatprep.subr.bf16.mxu0 0
    %221 = vmatpush1.bf16.msra.mxu0 %v198
    %222 = vmatprep.subr.bf16.mxu0 0
    %223 = vmatpush1.bf16.msra.mxu0 %v199
    %224 = vmatprep.subr.bf16.mxu0 0
    %225 = vmatpush1.bf16.msra.mxu0 0
    %226 = vmatprep.subr.bf16.mxu0 0
    %227 = vmatpush1.bf16.msra.mxu0 0
    %228 = vmatprep.subr.bf16.mxu0 0
    %229 = vmatpush1.bf16.msra.mxu0 0
    %230 = vmatprep.subr.bf16.mxu0 0
    %231 = vmatpush1.bf16.msra.mxu0 0
    %232 = vmatprep.subr.bf16.mxu0 0
    %233 = vmatpush1.bf16.msra.mxu0 0
    %234 = vmatprep.subr.bf16.mxu0 0
    %235 = vmatpush1.bf16.msra.mxu0 0
    %236 = vmatprep.subr.bf16.mxu0 0
    %237 = vmatpush1.bf16.msra.mxu0 0
    %238 = vmatprep.subr.bf16.mxu0 0
    %239 = vmatpush1.bf16.msra.mxu0 0
    %240 = vmatprep.mubr.bf16.mxu0 0
    %241 = vmatmul.mubr.bf16.gmra.mrb[0].mxu0 %v144
    %v242 = vpop.f32.mrb[0].mxu0
    %v243 = vadd.f32 0.0, %v242
    %v244 = vpop.f32.mrb[0].mxu0
    %v245 = vpop.f32.mrb[0].mxu0
    %v246 = vadd.f32 0.0, %v245
    %v247 = vpop.f32.mrb[0].mxu0
    %248 = vmatprep.mubr.bf16.mxu0 0
    %249 = vmatmul.mubr.bf16.gmra.mrb[0].mxu0 %v145
    %v250 = vpop.f32.mrb[0].mxu0
    %v251 = vadd.f32 0.0, %v250
    %v252 = vpop.f32.mrb[0].mxu0
    %v253 = vpop.f32.mrb[0].mxu0
    %v254 = vadd.f32 0.0, %v253
    %v255 = vpop.f32.mrb[0].mxu0
    %256 = vmatprep.mubr.bf16.mxu0 0
    %257 = vmatmul.mubr.bf16.gmra.mrb[0].mxu0 %v146
    %v258 = vpop.f32.mrb[0].mxu0
    %v259 = vadd.f32 0.0, %v258
    %v260 = vpop.f32.mrb[0].mxu0
    %v261 = vpop.f32.mrb[0].mxu0
    %v262 = vadd.f32 0.0, %v261
    %v263 = vpop.f32.mrb[0].mxu0
    %264 = vmatprep.mubr.bf16.mxu0 0
    %265 = vmatmul.mubr.bf16.gmra.mrb[0].mxu0 %v147
    %v266 = vpop.f32.mrb[0].mxu0
    %v267 = vadd.f32 0.0, %v266
    %v268 = vpop.f32.mrb[0].mxu0
    %v269 = vpop.f32.mrb[0].mxu0
    %v270 = vadd.f32 0.0, %v269
    %v271 = vpop.f32.mrb[0].mxu0
    %272 = vmatprep.mubr.bf16.mxu0 0
    %273 = vmatmul.mubr.bf16.gmra.mrb[0].mxu0 %v148
    %v274 = vpop.f32.mrb[0].mxu0
    %v275 = vadd.f32 0.0, %v274
    %v276 = vpop.f32.mrb[0].mxu0
    %v277 = vpop.f32.mrb[0].mxu0
    %v278 = vadd.f32 0.0, %v277
    %v279 = vpop.f32.mrb[0].mxu0
    %280 = vmatprep.mubr.bf16.mxu0 0
    %281 = vmatmul.mubr.bf16.gmra.mrb[0].mxu0 %v149
    %v282 = vpop.f32.mrb[0].mxu0
    %v283 = vadd.f32 0.0, %v282
    %v284 = vpop.f32.mrb[0].mxu0
    %v285 = vpop.f32.mrb[0].mxu0
    %v286 = vadd.f32 0.0, %v285
    %v287 = vpop.f32.mrb[0].mxu0
    %288 = vmatprep.mubr.bf16.mxu0 0
    %289 = vmatmul.mubr.bf16.gmra.mrb[0].mxu0 %v150
    %v290 = vpop.f32.mrb[0].mxu0
    %v291 = vadd.f32 0.0, %v290
    %v292 = vpop.f32.mrb[0].mxu0
    %v293 = vpop.f32.mrb[0].mxu0
    %v294 = vadd.f32 0.0, %v293
    %v295 = vpop.f32.mrb[0].mxu0
    %296 = vmatprep.mubr.bf16.mxu0 0
    %297 = vmatmul.mubr.bf16.gmra.mrb[0].mxu0 %v151
    %v298 = vpop.f32.mrb[0].mxu0
    %v299 = vadd.f32 0.0, %v298
    %v300 = vpop.f32.mrb[0].mxu0
    %v301 = vpop.f32.mrb[0].mxu0
    %v302 = vadd.f32 0.0, %v301
    %v303 = vpop.f32.mrb[0].mxu0
    %304 = vdwg.mxu0
    %v305 = vld [vmem:[#allocation2] sm:$0xff]
    %v306 = vld [vmem:[#allocation2 + $0x8] sm:$0xff]
    %v307 = vld [vmem:[#allocation2 + $0x10] sm:$0xff]
    %v308 = vld [vmem:[#allocation2 + $0x18] sm:$0xff]
    %v309 = vld [vmem:[#allocation2 + $0x20] sm:$0xff]
    %v310 = vld [vmem:[#allocation2 + $0x28] sm:$0xff]
    %v311 = vld [vmem:[#allocation2 + $0x30] sm:$0xff]
    %v312 = vld [vmem:[#allocation2 + $0x38] sm:$0xff]
    %v313 = vld [vmem:[#allocation2 + $0x40] sm:$0xff]
    %v314 = vld [vmem:[#allocation2 + $0x48] sm:$0xff]
    %v315 = vld [vmem:[#allocation2 + $0x50] sm:$0xff]
    %v316 = vld [vmem:[#allocation2 + $0x58] sm:$0xff]
    %v317 = vld [vmem:[#allocation2 + $0x60] sm:$0xff]
    %v318 = vld [vmem:[#allocation2 + $0x68] sm:$0xff]
    %v319 = vld [vmem:[#allocation2 + $0x70] sm:$0xff]
    %v320 = vld [vmem:[#allocation2 + $0x78] sm:$0xff]
    %v321 = vld [vmem:[#allocation3] sm:$0xf]
    %v322 = vld [vmem:[#allocation3 + $0x4] sm:$0xf]
    %v323 = vld [vmem:[#allocation3 + $0x8] sm:$0xf]
    %v324 = vld [vmem:[#allocation3 + $0xc] sm:$0xf]
    %v325 = vld [vmem:[#allocation3 + $0x10] sm:$0xf]
    %v326 = vld [vmem:[#allocation3 + $0x14] sm:$0xf]
    %v327 = vld [vmem:[#allocation3 + $0x18] sm:$0xf]
    %v328 = vld [vmem:[#allocation3 + $0x1c] sm:$0xf]
    %v329 = vld [vmem:[#allocation3 + $0x20] sm:$0xf]
    %v330 = vld [vmem:[#allocation3 + $0x24] sm:$0xf]
    %v331 = vld [vmem:[#allocation3 + $0x28] sm:$0xf]
    %v332 = vld [vmem:[#allocation3 + $0x2c] sm:$0xf]
    %v333 = vld [vmem:[#allocation3 + $0x30] sm:$0xf]
    %v334 = vld [vmem:[#allocation3 + $0x34] sm:$0xf]
    %v335 = vld [vmem:[#allocation3 + $0x38] sm:$0xf]
    %v336 = vld [vmem:[#allocation3 + $0x3c] sm:$0xf]
    %v337 = vpack.c.bf16 %v246, %v243
    %v338 = vpack.c.bf16 %v254, %v251
    %v339 = vpack.c.bf16 %v262, %v259
    %v340 = vpack.c.bf16 %v270, %v267
    %v341 = vpack.c.bf16 %v278, %v275
    %v342 = vpack.c.bf16 %v286, %v283
    %v343 = vpack.c.bf16 %v294, %v291
    %v344 = vpack.c.bf16 %v302, %v299
    %v361 = vunpack.c.l.b16 %v321
    %v362 = vunpack.c.l.b16 %v322
    %v363 = vunpack.c.l.b16 %v323
    %v364 = vunpack.c.l.b16 %v324
    %v365 = vunpack.c.l.b16 %v325
    %v366 = vunpack.c.l.b16 %v326
    %v367 = vunpack.c.l.b16 %v327
    %v368 = vunpack.c.l.b16 %v328
    %v369 = vunpack.c.l.b16 %v329
    %v370 = vunpack.c.l.b16 %v330
    %v371 = vunpack.c.l.b16 %v331
    %v372 = vunpack.c.l.b16 %v332
    %v373 = vunpack.c.l.b16 %v333
    %v374 = vunpack.c.l.b16 %v334
    %v375 = vunpack.c.l.b16 %v335
    %v376 = vunpack.c.l.b16 %v336
    %v377 = vpack.c.b16 %v362, %v361
    %v378 = vpack.c.b16 %v364, %v363
    %v379 = vpack.c.b16 %v366, %v365
    %v380 = vpack.c.b16 %v368, %v367
    %v381 = vpack.c.b16 %v370, %v369
    %v382 = vpack.c.b16 %v372, %v371
    %v383 = vpack.c.b16 %v374, %v373
    %v384 = vpack.c.b16 %v376, %v375
    %393 = vmatprep.subr.bf16.mxu0 0
    %394 = vmatpush1.bf16.msra.mxu0 %v337
    %395 = vmatprep.subr.bf16.mxu0 0
    %396 = vmatpush1.bf16.msra.mxu0 %v338
    %397 = vmatprep.subr.bf16.mxu0 0
    %398 = vmatpush1.bf16.msra.mxu0 %v339
    %399 = vmatprep.subr.bf16.mxu0 0
    %400 = vmatpush1.bf16.msra.mxu0 %v340
    %401 = vmatprep.subr.bf16.mxu0 0
    %402 = vmatpush1.bf16.msra.mxu0 %v341
    %403 = vmatprep.subr.bf16.mxu0 0
    %404 = vmatpush1.bf16.msra.mxu0 %v342
    %405 = vmatprep.subr.bf16.mxu0 0
    %406 = vmatpush1.bf16.msra.mxu0 %v343
    %407 = vmatprep.subr.bf16.mxu0 0
    %408 = vmatpush1.bf16.msra.mxu0 %v344
    %409 = vmatprep.subr.bf16.mxu0 0
    %410 = vmatpush1.bf16.msra.mxu0 0
    %411 = vmatprep.subr.bf16.mxu0 0
    %412 = vmatpush1.bf16.msra.mxu0 0
    %413 = vmatprep.subr.bf16.mxu0 0
    %414 = vmatpush1.bf16.msra.mxu0 0
    %415 = vmatprep.subr.bf16.mxu0 0
    %416 = vmatpush1.bf16.msra.mxu0 0
    %417 = vmatprep.subr.bf16.mxu0 0
    %418 = vmatpush1.bf16.msra.mxu0 0
    %419 = vmatprep.subr.bf16.mxu0 0
    %420 = vmatpush1.bf16.msra.mxu0 0
    %421 = vmatprep.subr.bf16.mxu0 0
    %422 = vmatpush1.bf16.msra.mxu0 0
    %423 = vmatprep.subr.bf16.mxu0 0
    %424 = vmatpush1.bf16.msra.mxu0 0
    %425 = vmatprep.mubr.bf16.mxu0 0
    %426 = vmatmul.mubr.bf16.gmra.mrb[0].mxu0 %v377
    %v427 = vpop.f32.mrb[0].mxu0
    %v428 = vadd.f32 0.0, %v427
    %v429 = vpop.f32.mrb[0].mxu0
    %v430 = vpop.f32.mrb[0].mxu0
    %v431 = vadd.f32 0.0, %v430
    %v432 = vpop.f32.mrb[0].mxu0
    %433 = vmatprep.mubr.bf16.mxu0 0
    %434 = vmatmul.mubr.bf16.gmra.mrb[0].mxu0 %v378
    %v435 = vpop.f32.mrb[0].mxu0
    %v436 = vadd.f32 0.0, %v435
    %v437 = vpop.f32.mrb[0].mxu0
    %v438 = vpop.f32.mrb[0].mxu0
    %v439 = vadd.f32 0.0, %v438
    %v440 = vpop.f32.mrb[0].mxu0
    %441 = vmatprep.mubr.bf16.mxu0 0
    %442 = vmatmul.mubr.bf16.gmra.mrb[0].mxu0 %v379
    %v443 = vpop.f32.mrb[0].mxu0
    %v444 = vadd.f32 0.0, %v443
    %v445 = vpop.f32.mrb[0].mxu0
    %v446 = vpop.f32.mrb[0].mxu0
    %v447 = vadd.f32 0.0, %v446
    %v448 = vpop.f32.mrb[0].mxu0
    %449 = vmatprep.mubr.bf16.mxu0 0
    %450 = vmatmul.mubr.bf16.gmra.mrb[0].mxu0 %v380
    %v451 = vpop.f32.mrb[0].mxu0
    %v452 = vadd.f32 0.0, %v451
    %v453 = vpop.f32.mrb[0].mxu0
    %v454 = vpop.f32.mrb[0].mxu0
    %v455 = vadd.f32 0.0, %v454
    %v456 = vpop.f32.mrb[0].mxu0
    %457 = vmatprep.mubr.bf16.mxu0 0
    %458 = vmatmul.mubr.bf16.gmra.mrb[0].mxu0 %v381
    %v459 = vpop.f32.mrb[0].mxu0
    %v460 = vadd.f32 0.0, %v459
    %v461 = vpop.f32.mrb[0].mxu0
    %v462 = vpop.f32.mrb[0].mxu0
    %v463 = vadd.f32 0.0, %v462
    %v464 = vpop.f32.mrb[0].mxu0
    %465 = vmatprep.mubr.bf16.mxu0 0
    %466 = vmatmul.mubr.bf16.gmra.mrb[0].mxu0 %v382
    %v467 = vpop.f32.mrb[0].mxu0
    %v468 = vadd.f32 0.0, %v467
    %v469 = vpop.f32.mrb[0].mxu0
    %v470 = vpop.f32.mrb[0].mxu0
    %v471 = vadd.f32 0.0, %v470
    %v472 = vpop.f32.mrb[0].mxu0
    %473 = vmatprep.mubr.bf16.mxu0 0
    %474 = vmatmul.mubr.bf16.gmra.mrb[0].mxu0 %v383
    %v475 = vpop.f32.mrb[0].mxu0
    %v476 = vadd.f32 0.0, %v475
    %v477 = vpop.f32.mrb[0].mxu0
    %v478 = vpop.f32.mrb[0].mxu0
    %v479 = vadd.f32 0.0, %v478
    %v480 = vpop.f32.mrb[0].mxu0
    %481 = vmatprep.mubr.bf16.mxu0 0
    %482 = vmatmul.mubr.bf16.gmra.mrb[0].mxu0 %v384
    %v483 = vpop.f32.mrb[0].mxu0
    %v484 = vadd.f32 0.0, %v483
    %v485 = vpop.f32.mrb[0].mxu0
    %v486 = vpop.f32.mrb[0].mxu0
    %v487 = vadd.f32 0.0, %v486
    %v488 = vpop.f32.mrb[0].mxu0
    %489 = vdwg.mxu0
    %v490 = vadd.f32 %v305, %v428
    %v491 = vadd.f32 %v306, %v431
    %v492 = vadd.f32 %v307, %v436
    %v493 = vadd.f32 %v308, %v439
    %v494 = vadd.f32 %v309, %v444
    %v495 = vadd.f32 %v310, %v447
    %v496 = vadd.f32 %v311, %v452
    %v497 = vadd.f32 %v312, %v455
    %v498 = vadd.f32 %v313, %v460
    %v499 = vadd.f32 %v314, %v463
    %v500 = vadd.f32 %v315, %v468
    %v501 = vadd.f32 %v316, %v471
    %v502 = vadd.f32 %v317, %v476
    %v503 = vadd.f32 %v318, %v479
    %v504 = vadd.f32 %v319, %v484
    %v505 = vadd.f32 %v320, %v487
    %506 = vst [vmem:[#allocation2] sm:$0xff] %v490
    %507 = vst [vmem:[#allocation2 + $0x8] sm:$0xff] %v491
    %508 = vst [vmem:[#allocation2 + $0x10] sm:$0xff] %v492
    %509 = vst [vmem:[#allocation2 + $0x18] sm:$0xff] %v493
    %510 = vst [vmem:[#allocation2 + $0x20] sm:$0xff] %v494
    %511 = vst [vmem:[#allocation2 + $0x28] sm:$0xff] %v495
    %512 = vst [vmem:[#allocation2 + $0x30] sm:$0xff] %v496
    %513 = vst [vmem:[#allocation2 + $0x38] sm:$0xff] %v497
    %514 = vst [vmem:[#allocation2 + $0x40] sm:$0xff] %v498
    %515 = vst [vmem:[#allocation2 + $0x48] sm:$0xff] %v499
    %516 = vst [vmem:[#allocation2 + $0x50] sm:$0xff] %v500
    %517 = vst [vmem:[#allocation2 + $0x58] sm:$0xff] %v501
    %518 = vst [vmem:[#allocation2 + $0x60] sm:$0xff] %v502
    %519 = vst [vmem:[#allocation2 + $0x68] sm:$0xff] %v503
    %520 = vst [vmem:[#allocation2 + $0x70] sm:$0xff] %v504
    %521 = vst [vmem:[#allocation2 + $0x78] sm:$0xff] %v505
    // Predicated region
    $region34: #{tpu_custom_call.1} parent=1 // pred_check
      %p522 = pneg %p60
    $region35: #{tpu_custom_call.1} parent=1 // pred_check_branch
      %524 = sbr.rel (%p522) target = $region37
    $region36: #{tpu_custom_call.1} parent=1 // pred_region
      %v525 = vld [vmem:[#allocation2] sm:$0xff]
      %v526 = vld [vmem:[#allocation2 + $0x8] sm:$0xff]
      %v527 = vld [vmem:[#allocation2 + $0x10] sm:$0xff]
      %v528 = vld [vmem:[#allocation2 + $0x18] sm:$0xff]
      %v529 = vld [vmem:[#allocation2 + $0x20] sm:$0xff]
      %v530 = vld [vmem:[#allocation2 + $0x28] sm:$0xff]
      %v531 = vld [vmem:[#allocation2 + $0x30] sm:$0xff]
      %v532 = vld [vmem:[#allocation2 + $0x38] sm:$0xff]
      %v533 = vld [vmem:[#allocation2 + $0x40] sm:$0xff]
      %v534 = vld [vmem:[#allocation2 + $0x48] sm:$0xff]
      %v535 = vld [vmem:[#allocation2 + $0x50] sm:$0xff]
      %v536 = vld [vmem:[#allocation2 + $0x58] sm:$0xff]
      %v537 = vld [vmem:[#allocation2 + $0x60] sm:$0xff]
      %v538 = vld [vmem:[#allocation2 + $0x68] sm:$0xff]
      %v539 = vld [vmem:[#allocation2 + $0x70] sm:$0xff]
      %v540 = vld [vmem:[#allocation2 + $0x78] sm:$0xff]
      %v541 = vld [vmem:[%s3] sm:$0x1]
      %v543 = vlaneseq
      %v544 = vshrl.u32 %v543, 7
      %v545 = vsub.s32 0, %v544
      %v546 = vrot.slane %v541, %v545
      %v548 = vadd.f32 %v525, %v546
      %v549 = vadd.f32 %v526, %v546
      %v550 = vadd.f32 %v527, %v546
      %v551 = vadd.f32 %v528, %v546
      %v552 = vadd.f32 %v529, %v546
      %v553 = vadd.f32 %v530, %v546
      %v554 = vadd.f32 %v531, %v546
      %v555 = vadd.f32 %v532, %v546
      %v556 = vadd.f32 %v533, %v546
      %v557 = vadd.f32 %v534, %v546
      %v558 = vadd.f32 %v535, %v546
      %v559 = vadd.f32 %v536, %v546
      %v560 = vadd.f32 %v537, %v546
      %v561 = vadd.f32 %v538, %v546
      %v562 = vadd.f32 %v539, %v546
      %v563 = vadd.f32 %v540, %v546
      %v564 = vpack.c.bf16 %v549, %v548
      %v565 = vpack.c.bf16 %v551, %v550
      %v566 = vpack.c.bf16 %v553, %v552
      %v567 = vpack.c.bf16 %v555, %v554
      %v568 = vpack.c.bf16 %v557, %v556
      %v569 = vpack.c.bf16 %v559, %v558
      %v570 = vpack.c.bf16 %v561, %v560
      %v571 = vpack.c.bf16 %v563, %v562
      %v580 = vunpack.c.l.b16 %v564
      %v581 = vunpack.c.h.b16 %v564
      %v582 = vunpack.c.l.b16 %v565
      %v583 = vunpack.c.h.b16 %v565
      %v584 = vunpack.c.l.b16 %v566
      %v585 = vunpack.c.h.b16 %v566
      %v586 = vunpack.c.l.b16 %v567
      %v587 = vunpack.c.h.b16 %v567
      %v588 = vunpack.c.l.b16 %v568
      %v589 = vunpack.c.h.b16 %v568
      %v590 = vunpack.c.l.b16 %v569
      %v591 = vunpack.c.h.b16 %v569
      %v592 = vunpack.c.l.b16 %v570
      %v593 = vunpack.c.h.b16 %v570
      %v594 = vunpack.c.l.b16 %v571
      %v595 = vunpack.c.h.b16 %v571
      %v596 = vpack.c.b16 %v580, %v580
      %v597 = vpack.c.b16 %v581, %v581
      %v598 = vpack.c.b16 %v582, %v582
      %v599 = vpack.c.b16 %v583, %v583
      %v600 = vpack.c.b16 %v584, %v584
      %v601 = vpack.c.b16 %v585, %v585
      %v602 = vpack.c.b16 %v586, %v586
      %v603 = vpack.c.b16 %v587, %v587
      %v604 = vpack.c.b16 %v588, %v588
      %v605 = vpack.c.b16 %v589, %v589
      %v606 = vpack.c.b16 %v590, %v590
      %v607 = vpack.c.b16 %v591, %v591
      %v608 = vpack.c.b16 %v592, %v592
      %v609 = vpack.c.b16 %v593, %v593
      %v610 = vpack.c.b16 %v594, %v594
      %v611 = vpack.c.b16 %v595, %v595
      %628 = vst [vmem:[#allocation9] sm:$0xf] %v596
      %629 = vst [vmem:[#allocation9 + $0x4] sm:$0xf] %v597
      %630 = vst [vmem:[#allocation9 + $0x8] sm:$0xf] %v598
      %631 = vst [vmem:[#allocation9 + $0xc] sm:$0xf] %v599
      %632 = vst [vmem:[#allocation9 + $0x10] sm:$0xf] %v600
      %633 = vst [vmem:[#allocation9 + $0x14] sm:$0xf] %v601
      %634 = vst [vmem:[#allocation9 + $0x18] sm:$0xf] %v602
      %635 = vst [vmem:[#allocation9 + $0x1c] sm:$0xf] %v603
      %636 = vst [vmem:[#allocation9 + $0x20] sm:$0xf] %v604
      %637 = vst [vmem:[#allocation9 + $0x24] sm:$0xf] %v605
      %638 = vst [vmem:[#allocation9 + $0x28] sm:$0xf] %v606
      %639 = vst [vmem:[#allocation9 + $0x2c] sm:$0xf] %v607
      %640 = vst [vmem:[#allocation9 + $0x30] sm:$0xf] %v608
      %641 = vst [vmem:[#allocation9 + $0x34] sm:$0xf] %v609
      %642 = vst [vmem:[#allocation9 + $0x38] sm:$0xf] %v610
      %643 = vst [vmem:[#allocation9 + $0x3c] sm:$0xf] %v611
    $region37: #{tpu_custom_call.1} parent=1 // pred_fallthru
      _
    // Predicated region
    $region38: #{tpu_custom_call.1} parent=1 // pred_check
      _
    $region39: #{tpu_custom_call.1} parent=1 // pred_check_branch
      %645 = sbr.rel (0) target = $region41
    $region40: #{tpu_custom_call.1} parent=1 // pred_region
      %s647 = ssub.s32 1024, 1024
      %648 = vsyncadd [#allocation5], %s647
      %s649 = sshll.u32 [#allocation9], 4
      %s650 = int_to_ptr.vmem [resolvable:$true] %s649
      %655 = dma.vmem_to_hbm [thread:$0]  %s650, 1024, %s4, [#allocation5], 64, 64, 4
    $region41: #{tpu_custom_call.1} parent=1 // pred_fallthru
      _
    // Predicated region
    $region42: #{tpu_custom_call.1} parent=1 // pred_check
      _
    $region43: #{tpu_custom_call.1} parent=1 // pred_check_branch
      %657 = sbr.rel (0) target = $region45
    $region44: #{tpu_custom_call.1} parent=1 // pred_region
      %658 = dma.done [#allocation5], 1024
    $region45: #{tpu_custom_call.1} parent=1 // pred_fallthru
      _
    %659 = vsyncpa [#allocation4], 1
    %660 = vsyncpa [#allocation7], 1
    %661 = vsyncpa [#allocation5], 1

</llo_original>
